<compile_context>
chip_gen: v6e
topology: v6e:2x2x1
jax: 0.10.0
libtpu: 0.0.40
codegen_flags: <defaults>
</compile_context>

<pallas_src>
import numpy as np
import jax
import jax.numpy as jnp
from jax.experimental import pallas as pl
from jax.experimental.pallas import tpu as pltpu

VMEM_LIMIT_BYTES = 32 * 1024 * 1024     # explicit scoped-VMEM limit (>= v5e's 16 MiB default)
STREAM_VMEM_BUDGET = 6 * 1024 * 1024    # budget for column-streamed blocks + temporaries


def _round_up(x, m):
    return ((x + m - 1) // m) * m


def _round_down(x, m):
    return (x // m) * m


# ---------------------------------------------------------------------------
# Pallas kernel: fused pairwise layer-1 reconstruction + MLP tail.
# One (batch element, column tile) per grid step.
#
#   proj_ref : (1, H, P)  per-batch layer-1 projections, P = 1 + J + M columns:
#              [noop_pre | job_proj_j + b1 (j=0..J-1) | ma_proj_m (m=0..M-1)]
#   e_ref    : (P, T)     0/1 selection matrix tile; column c picks the noop
#              column or (job j, machine m) so that
#              x[:, c] = proj @ e[:, c] = job_proj[:, j] + ma_proj[:, m] + b1
#   w2_ref   : (H, H)     layer-2 weight in torch [out, in] layout (used as-is)
#   o_ref    : (1, 1, T)  lane-dense logits for this tile
# ---------------------------------------------------------------------------
def _fjsp_pairwise_mlp_kernel(proj_ref, e_ref, w2_ref, b2_ref, w3_ref, b3_ref, o_ref):
    # Rebuild the layer-1 pre-activation for this column tile on the MXU
    # (fused broadcast-add; exact since E is 0/1 with two ones per column).
    x = jnp.dot(proj_ref[0], e_ref[...], preferred_element_type=jnp.float32)   # (H, T)
    a1 = jnp.maximum(x, 0.0).astype(w2_ref.dtype)                              # ReLU (bf16 fast path)
    h2 = jnp.dot(w2_ref[...], a1, preferred_element_type=jnp.float32)          # (H, T) MXU
    a2 = jnp.maximum(h2 + b2_ref[...], 0.0)                                    # ReLU
    # H -> 1 head: VPU multiply + sublane (XLU) reduce; avoids an N=1 MXU matmul.
    o = jnp.sum(a2 * w3_ref[...], axis=0, keepdims=True) + b3_ref[...]         # (1, T)
    o_ref[...] = o[None].astype(o_ref.dtype)                                   # (1, 1, T)


def _build_selection_matrix(n_jobs, n_ma, n_cols_pad, dtype):
    """E[p, c]: 0/1 map from (noop | job | machine) projection columns onto the
    flat action columns: c = 0 -> noop, c = 1 + j*M + m -> (job j, machine m).
    Padded columns (>= 1 + J*M) are all-zero (finite garbage, sliced off)."""
    p = 1 + n_jobs + n_ma
    e = np.zeros((p, n_cols_pad), dtype=np.float32)
    e[0, 0] = 1.0
    pair = np.arange(n_jobs * n_ma)
    cols = 1 + pair
    e[1 + pair // n_ma, cols] = 1.0
    e[1 + n_jobs + pair % n_ma, cols] = 1.0
    return jnp.asarray(e, dtype=dtype)


def _pick_tile_cols(n_cols, p, hdim, bs, itemsize):
    """Lane tile from a VMEM budget (multiple of 128), not a fixed constant."""
    # Per-lane bytes along the streamed column axis: double-buffered E block,
    # double-buffered (1, T) output block, ~4 H-tall f32 temporaries.
    per_lane = (2 * p + 2) * itemsize + 4 * hdim * 4
    tile = _round_down(max(STREAM_VMEM_BUDGET // per_lane, 128), 128)
    cols_pad_min = _round_up(n_cols, 128)
    tile = max(128, min(tile, cols_pad_min))
    # v7x megacore: keep >= 2 total grid steps so the "parallel" axes can be
    # sharded across both TensorCores (the batch axis usually provides them).
    if bs == 1 and tile >= cols_pad_min and cols_pad_min >= 256:
        tile = max(128, _round_down(cols_pad_min // 2, 128))
    return tile


def fjsp_pairwise_mlp_pallas(proj, n_jobs, n_ma, w2, b2, w3, b3,
                             *, compute_dtype=jnp.float32):
    """proj: [bs, H, 1+J+M] layer-1 projections (noop | job+b1 | machine).

    Returns logits [bs, 1 + J*M].  compute_dtype=jnp.bfloat16 halves streamed
    projection / W2 bytes on v6e/v7x (f32 accumulation is kept in the kernel).
    """
    bs, hdim, p = proj.shape
    assert p == 1 + n_jobs + n_ma
    n_cols = 1 + n_jobs * n_ma
    itemsize = jnp.dtype(compute_dtype).itemsize
    tile_cols = _pick_tile_cols(n_cols, p, hdim, bs, itemsize)
    n_cols_pad = _round_up(n_cols, tile_cols)          # tile divides pad: no partial blocks
    n_col_tiles = n_cols_pad // tile_cols

    e_mat = _build_selection_matrix(n_jobs, n_ma, n_cols_pad, compute_dtype)
    proj = proj.astype(compute_dtype)
    w2 = w2.astype(compute_dtype)

    out = pl.pallas_call(
        _fjsp_pairwise_mlp_kernel,
        out_shape=jax.ShapeDtypeStruct((bs, 1, n_cols_pad), jnp.float32),
        grid=(bs, n_col_tiles),
        in_specs=[
            pl.BlockSpec((1, hdim, p), lambda b, c: (b, 0, 0)),     # per-batch projections (tiny)
            pl.BlockSpec((p, tile_cols), lambda b, c: (0, c)),      # selection-matrix tile (tiny)
            pl.BlockSpec((hdim, hdim), lambda b, c: (0, 0)),        # W2 (torch [out,in]) resident
            pl.BlockSpec((hdim, 1), lambda b, c: (0, 0)),           # b2 column
            pl.BlockSpec((hdim, 1), lambda b, c: (0, 0)),           # w3 column
            pl.BlockSpec((1, 1), lambda b, c: (0, 0)),              # b3
        ],
        out_specs=pl.BlockSpec((1, 1, tile_cols), lambda b, c: (b, 0, c)),
        compiler_params=pltpu.CompilerParams(
            dimension_semantics=("parallel", "parallel"),
            vmem_limit_bytes=VMEM_LIMIT_BYTES),
    )(proj, e_mat, w2,
      b2.reshape(hdim, 1).astype(jnp.float32),
      w3.reshape(hdim, 1).astype(jnp.float32),
      b3.reshape(1, 1).astype(jnp.float32))
    return out[:, 0, :n_cols]


# ---------------------------------------------------------------------------
# FJSPActor forward (JAX glue + fused Pallas MLP).  jit-compatible.
# ---------------------------------------------------------------------------
def fjsp_actor_forward(params, next_op, action_mask, ops_emb, ma_emb,
                       *, compute_dtype=jnp.float32):
    bs, n_ma, emb = ma_emb.shape
    # job_emb = gather_by_index(ops_emb, td["next_op"], squeeze=False)
    job_emb = jnp.take_along_axis(ops_emb, next_op[:, :, None], axis=1)          # [bs, J, E]
    n_jobs = job_emb.shape[1]

    w1, b1 = params["w1"], params["b1"]
    hdim = w1.shape[1]

    # Split layer-1:  cat([job, ma]) @ W1 == job @ W1[:E] + ma @ W1[E:].
    # Project each embedding set ONCE, directly in [b, H, *] (features-on-sublane)
    # order, and fold b1 into the job half.  Only these tiny projections reach
    # the kernel; the [bs, J, M, H] pair tensor / concat / transpose never exist.
    job_proj = jnp.einsum("bje,eh->bhj", job_emb, w1[:emb]) + b1[None, :, None]  # [bs, H, J]
    ma_proj = jnp.einsum("bme,eh->bhm", ma_emb, w1[emb:])                        # [bs, H, M]
    noop_pre = (params["dummy"] @ w1 + b1)[None, :, None]                        # [1, H, 1]
    proj = jnp.concatenate(
        [jnp.broadcast_to(noop_pre, (bs, hdim, 1)), job_proj, ma_proj], axis=2)  # [bs, H, 1+J+M]

    logits = fjsp_pairwise_mlp_pallas(
        proj, n_jobs, n_ma, params["w2"], params["b2"], params["w3"], params["b3"],
        compute_dtype=compute_dtype)
    # NaN check (torch `assert`) is done by the caller, host-side — keeps this jittable.
    return logits, action_mask


# ---------------------------------------------------------------------------
# Deterministic parameter init (shapes from FJSPActor.__init__).
# w2 is stored in torch [out, in] layout so the kernel needs no transpose.
# ---------------------------------------------------------------------------
def init_params(key, embed_dim, hidden_dim):
    d_in = 2 * embed_dim
    ks = jax.random.split(key, 7)
    scale = 0.1
    return {
        "dummy": jax.random.uniform(ks[0], (d_in,), jnp.float32),                # torch.rand(2E)
        "w1": scale * jax.random.normal(ks[1], (d_in, hidden_dim), jnp.float32),  # [in, out]
        "b1": scale * jax.random.normal(ks[2], (hidden_dim,), jnp.float32),
        "w2": scale * jax.random.normal(ks[3], (hidden_dim, hidden_dim), jnp.float32),  # [out, in]
        "b2": scale * jax.random.normal(ks[4], (hidden_dim,), jnp.float32),
        "w3": scale * jax.random.normal(ks[5], (hidden_dim,), jnp.float32),       # [H] (out = 1)
        "b3": scale * jax.random.normal(ks[6], (1,), jnp.float32),
    }


# Pure-JAX reference of the ORIGINAL (non-fused) forward, for correctness.
def _forward_ref(params, next_op, ops_emb, ma_emb):
    bs, n_ma, emb = ma_emb.shape
    job_emb = jnp.take_along_axis(ops_emb, next_op[:, :, None], axis=1)
    n_jobs = job_emb.shape[1]
    job_exp = jnp.broadcast_to(job_emb[:, :, None, :], (bs, n_jobs, n_ma, emb))
    ma_exp = jnp.broadcast_to(ma_emb[:, None, :, :], (bs, n_jobs, n_ma, emb))
    h = jnp.concatenate([job_exp, ma_exp], -1).reshape(bs, n_jobs * n_ma, 2 * emb)
    h = jnp.concatenate(
        [jnp.broadcast_to(params["dummy"][None, None, :], (bs, 1, 2 * emb)), h], 1)
    h1 = jnp.maximum(h @ params["w1"] + params["b1"], 0.0)
    h2 = jnp.maximum(h1 @ params["w2"].T + params["b2"], 0.0)
    return h2 @ params["w3"] + params["b3"][0]


if __name__ == "__main__":
    embed_dim, hidden_dim = 32, 32
    bs, n_ops, n_jobs, n_ma = 2, 8, 4, 4

    key = jax.random.PRNGKey(0)
    k_par, k_ops, k_ma, k_idx = jax.random.split(key, 4)

    params = init_params(k_par, embed_dim, hidden_dim)
    ops_emb = jax.random.normal(k_ops, (bs, n_ops, embed_dim), jnp.float32)
    ma_emb = jax.random.normal(k_ma, (bs, n_ma, embed_dim), jnp.float32)
    next_op = jax.random.randint(k_idx, (bs, n_jobs), 0, n_ops)
    action_mask = jnp.ones((bs, 1 + n_jobs * n_ma), dtype=bool)

    fwd = jax.jit(fjsp_actor_forward)
    logits, mask = fwd(params, next_op, action_mask, ops_emb, ma_emb)
    logits = jax.block_until_ready(logits)

    # check_nan equivalent of the torch assert — host-side, outside jit.
    assert not bool(jnp.isnan(logits).any()), "Logits contain NaNs"

    ref = _forward_ref(params, next_op, ops_emb, ma_emb)
    assert logits.shape == (bs, 1 + n_jobs * n_ma)
    assert mask.shape == (bs, 1 + n_jobs * n_ma)
    assert jnp.allclose(logits, ref, atol=1e-4, rtol=1e-4), "f32 mismatch vs reference"

    # Optional bf16 stream path (recommended on v6e/v7x); looser tolerance.
    fwd_bf16 = jax.jit(lambda p, no, am, oe, me: fjsp_actor_forward(
        p, no, am, oe, me, compute_dtype=jnp.bfloat16))
    logits_bf16, _ = fwd_bf16(params, next_op, action_mask, ops_emb, ma_emb)
    logits_bf16 = jax.block_until_ready(logits_bf16)
    assert not bool(jnp.isnan(logits_bf16).any()), "bf16 logits contain NaNs"
    assert jnp.allclose(logits_bf16, ref, atol=5e-2, rtol=5e-2), "bf16 mismatch vs reference"

    print("KERNEL_OK")
</pallas_src>

<mosaic_0001>
module attributes {stable_mosaic.version = 11 : i64} {
  func.func @_fjsp_pairwise_mlp_kernel(%arg0: i32, %arg1: i32, %arg2: memref<1x32x9xf32, #tpu.memory_space<vmem>>, %arg3: memref<9x128xf32, #tpu.memory_space<vmem>>, %arg4: memref<32x32xf32, #tpu.memory_space<vmem>>, %arg5: memref<32x1xf32, #tpu.memory_space<vmem>>, %arg6: memref<32x1xf32, #tpu.memory_space<vmem>>, %arg7: memref<1x1xf32, #tpu.memory_space<vmem>>, %arg8: memref<1x1x128xf32, #tpu.memory_space<vmem>>) attributes {dimension_semantics = [#tpu.dimension_semantics<parallel>, #tpu.dimension_semantics<parallel>], iteration_bounds = array<i64: 2, 1>, scalar_prefetch = 0 : i64, scratch_operands = 0 : i64, tpu.core_type = #tpu.core_type<tc>, window_params = [{transform_indices = @transform_0, window_bounds = array<i64: 1, 32, 9>}, {transform_indices = @transform_1, window_bounds = array<i64: 9, 128>}, {pipeline_mode = #tpu.pipeline_mode<synchronous>, transform_indices = @transform_2, window_bounds = array<i64: 32, 32>}, {pipeline_mode = #tpu.pipeline_mode<synchronous>, transform_indices = @transform_3, window_bounds = array<i64: 32, 1>}, {pipeline_mode = #tpu.pipeline_mode<synchronous>, transform_indices = @transform_4, window_bounds = array<i64: 32, 1>}, {pipeline_mode = #tpu.pipeline_mode<synchronous>, transform_indices = @transform_5, window_bounds = array<i64: 1, 1>}, {transform_indices = @transform_6, window_bounds = array<i64: 1, 1, 128>}]} {
    %c0 = arith.constant 0 : index
    %c0_0 = arith.constant 0 : index
    %c0_1 = arith.constant 0 : index
    %0 = vector.load %arg2[%c0, %c0_0, %c0_1] : memref<1x32x9xf32, #tpu.memory_space<vmem>>, vector<1x32x9xf32>
    %1 = vector.shape_cast %0 : vector<1x32x9xf32> to vector<32x9xf32>
    %c0_2 = arith.constant 0 : index
    %c0_3 = arith.constant 0 : index
    %2 = vector.load %arg3[%c0_2, %c0_3] : memref<9x128xf32, #tpu.memory_space<vmem>>, vector<9x128xf32>
    %cst = arith.constant dense<0.000000e+00> : vector<32x128xf32>
    %3 = tpu.matmul %1, %2, %cst {dimension_numbers = #tpu.dot_dimension_numbers<[1], [0], [0], [1], [0, 0, 1, 1], [], []>} : vector<32x9xf32>, vector<9x128xf32>, vector<32x128xf32> -> vector<32x128xf32>
    %cst_4 = arith.constant 0.000000e+00 : f32
    %4 = vector.broadcast %cst_4 : f32 to vector<32x128xf32>
    %5 = arith.maximumf %3, %4 : vector<32x128xf32>
    %c0_5 = arith.constant 0 : index
    %c0_6 = arith.constant 0 : index
    %6 = vector.load %arg4[%c0_5, %c0_6] : memref<32x32xf32, #tpu.memory_space<vmem>>, vector<32x32xf32>
    %cst_7 = arith.constant dense<0.000000e+00> : vector<32x128xf32>
    %7 = tpu.matmul %6, %5, %cst_7 {dimension_numbers = #tpu.dot_dimension_numbers<[1], [0], [0], [1], [0, 0, 1, 1], [], []>} : vector<32x32xf32>, vector<32x128xf32>, vector<32x128xf32> -> vector<32x128xf32>
    %c0_8 = arith.constant 0 : index
    %c0_9 = arith.constant 0 : index
    %8 = vector.load %arg5[%c0_8, %c0_9] : memref<32x1xf32, #tpu.memory_space<vmem>>, vector<32x1xf32>
    %9 = vector.broadcast %8 : vector<32x1xf32> to vector<32x128xf32>
    %10 = arith.addf %7, %9 : vector<32x128xf32>
    %cst_10 = arith.constant 0.000000e+00 : f32
    %11 = vector.broadcast %cst_10 : f32 to vector<32x128xf32>
    %12 = arith.maximumf %10, %11 : vector<32x128xf32>
    %c0_11 = arith.constant 0 : index
    %c0_12 = arith.constant 0 : index
    %13 = vector.load %arg6[%c0_11, %c0_12] : memref<32x1xf32, #tpu.memory_space<vmem>>, vector<32x1xf32>
    %14 = vector.broadcast %13 : vector<32x1xf32> to vector<32x128xf32>
    %15 = arith.mulf %12, %14 : vector<32x128xf32>
    %cst_13 = arith.constant dense<0.000000e+00> : vector<128xf32>
    %16 = vector.multi_reduction <add>, %15, %cst_13 [0] : vector<32x128xf32> to vector<128xf32>
    %17 = vector.shape_cast %16 : vector<128xf32> to vector<1x128xf32>
    %c0_14 = arith.constant 0 : index
    %c0_15 = arith.constant 0 : index
    %18 = vector.load %arg7[%c0_14, %c0_15] : memref<1x1xf32, #tpu.memory_space<vmem>>, vector<1x1xf32>
    %19 = vector.broadcast %18 : vector<1x1xf32> to vector<1x128xf32>
    %20 = arith.addf %17, %19 : vector<1x128xf32>
    %21 = vector.shape_cast %20 : vector<1x128xf32> to vector<1x1x128xf32>
    %c0_16 = arith.constant 0 : index
    %c0_17 = arith.constant 0 : index
    %c0_18 = arith.constant 0 : index
    %22 = vector.load %arg8[%c0_16, %c0_17, %c0_18] : memref<1x1x128xf32, #tpu.memory_space<vmem>>, vector<1x1x128xf32>
    tpu.vector_store %arg8[%c0_16, %c0_17, %c0_18], %21 {strides = array<i32>} : memref<1x1x128xf32, #tpu.memory_space<vmem>>, vector<1x1x128xf32>,
    return
  }
  func.func @transform_0(%arg0: i32, %arg1: i32) -> (i32, i32, i32) {
    %c0_i32 = arith.constant 0 : i32
    %c0_i32_0 = arith.constant 0 : i32
    %c0_i32_1 = arith.constant 0 : i32
    return %arg0, %c0_i32, %c0_i32_0 : i32, i32, i32
  }
  func.func @transform_1(%arg0: i32, %arg1: i32) -> (i32, i32) {
    %c0_i32 = arith.constant 0 : i32
    %c0_i32_0 = arith.constant 0 : i32
    return %c0_i32, %arg1 : i32, i32
  }
  func.func @transform_2(%arg0: i32, %arg1: i32) -> (i32, i32) {
    %c0_i32 = arith.constant 0 : i32
    %c0_i32_0 = arith.constant 0 : i32
    %c0_i32_1 = arith.constant 0 : i32
    return %c0_i32, %c0_i32_0 : i32, i32
  }
  func.func @transform_3(%arg0: i32, %arg1: i32) -> (i32, i32) {
    %c0_i32 = arith.constant 0 : i32
    %c0_i32_0 = arith.constant 0 : i32
    %c0_i32_1 = arith.constant 0 : i32
    return %c0_i32, %c0_i32_0 : i32, i32
  }
  func.func @transform_4(%arg0: i32, %arg1: i32) -> (i32, i32) {
    %c0_i32 = arith.constant 0 : i32
    %c0_i32_0 = arith.constant 0 : i32
    %c0_i32_1 = arith.constant 0 : i32
    return %c0_i32, %c0_i32_0 : i32, i32
  }
  func.func @transform_5(%arg0: i32, %arg1: i32) -> (i32, i32) {
    %c0_i32 = arith.constant 0 : i32
    %c0_i32_0 = arith.constant 0 : i32
    %c0_i32_1 = arith.constant 0 : i32
    return %c0_i32, %c0_i32_0 : i32, i32
  }
  func.func @transform_6(%arg0: i32, %arg1: i32) -> (i32, i32, i32) {
    %c0_i32 = arith.constant 0 : i32
    %c0_i32_0 = arith.constant 0 : i32
    return %arg0, %c0_i32, %arg1 : i32, i32, i32
  }
}

</mosaic_0001>

<llo_original>
// kernel: fjsp_actor_forward.1
$region0: #{fjsp_actor_forward.1}
  #allocation0 [shape = 'u32[]', space=smem, size = 0x4, offset = 0x4, fixed_abs, tag = 'smem constant byte address 0x4 - core index']
  #allocation1 [shape = 'u32[144,128]{1,0:T(1,128)}', space=vmem, size = 0x12000, scoped, tag = 'internal scratch']
  #allocation2 [shape = 'f32[1,1]{1,0:T(1,128)S(1)}', space=vmem, size = 0x200, scoped, tag = 'scoped memory for fjsp_actor_forward.1']
  %s0 = inlined_call_operand.vmem [shape: f32[2,32,9], index: 0, kind: input, shape index: {}]
  %s1 = inlined_call_operand.vmem [shape: f32[9,128], index: 1, kind: input, shape index: {}]
  %s2 = inlined_call_operand.vmem [shape: f32[32,32], index: 2, kind: input, shape index: {}]
  %s3 = inlined_call_operand.vmem [shape: f32[32,1], index: 3, kind: input, shape index: {}]
  %s4 = inlined_call_operand.vmem [shape: f32[32,1], index: 4, kind: input, shape index: {}]
  %s5 = inlined_call_operand.<no memory space> [shape: f32[1,1], index: 5, kind: input, shape index: {}]
  %s6 = inlined_call_operand.hbm [shape: f32[2,1,128], index: 6, kind: output, shape index: {}]
  %s7 = sld [smem:[#allocation0]]
  $region57: #{fjsp_actor_forward.1} parent=0
    _
  %s9 = ssub.s32 1, %s7
  %s10 = scalar_select 0, %s9, %s7
  %v11 = vstv %s5
  %12 = vst [vmem:[#allocation2] sm:$0x1] %v11
  $region1: #{fjsp_actor_forward.1} parent=0
    #allocation3 [shape = 'u8[1024]{0}', space=vmem, size = 0x400, scoped, tag = 'output window, operand 0']
    #allocation4 [shape = 's32[2]{0}', space=sflag, size = 0x8, scoped, tag = 'scoped memory for fjsp_actor_forward.1']
    %13 = vsyncpa [#allocation4], 0
    %s14 = scalar_lea.sflag [#allocation4], 1
    %15 = vsyncpa %s14, 0
    loop: start=0, step=1, limit=4
    $region2: #{fjsp_actor_forward.1} parent=1 // loop_pre_header
      _
    $region3: #{fjsp_actor_forward.1} parent=1 // loop_header
      %s17 = sphi 0, %s21
      %p18 = scmp.ge.s32.totalorder %s17, 4
      %s24 = sphi 0, %s36
      %s25 = sphi 0, %s32
      %s26 = sphi 0, %s24
      %s27 = sphi 0, %s25
      %s28 = sphi 0, %s26
      %s29 = sphi 0, %s27
      %s39 = sphi 0, %s41
      %s42 = sphi 0, %s39
      %s43 = sphi 0, %s42
      %s59 = sphi 0, %s43
      %s65 = sphi 0, %s67
      %s68 = sphi 0, %s65
      %s69 = sphi 0, %s68
      %s85 = sphi 0, %s69
      %s89 = sphi 0, %s89
      %s91 = sphi 0, %s89
      %s92 = sphi 0, %s91
      %s106 = sphi 0, %s92
      %s110 = sphi 0, %s110
      %s112 = sphi 0, %s110
      %s113 = sphi 0, %s112
      %s127 = sphi 0, %s113
      %s131 = sphi 0, %s131
      %s133 = sphi 0, %s131
      %s134 = sphi 0, %s133
      %s148 = sphi 0, %s134
      %s152 = sphi 0, %s152
      %s154 = sphi 0, %s152
      %s155 = sphi 0, %s154
      %s169 = sphi 0, %s155
      %s177 = sphi 0, %s179
      %s180 = sphi 0, %s177
      %s181 = sphi 0, %s180
      %s197 = sphi 0, %s181
    $region4: #{fjsp_actor_forward.1} parent=1 // loop_header_branch
      %20 = sbr.rel (%p18) target = $region8
    $region5: #{fjsp_actor_forward.1} parent=1 // loop_body
      %s22 = ssub.s32 %s17, 1
      %s23 = ssub.s32 %s17, 2
      %s30 = sadd.s32 1, %s25
      %p31 = scmp.ge.s32.totalorder %s30, 1
      %s32 = scalar_select %p31, 0, %s30
      %s33 = sadd.s32 1, %s24
      %s34 = scalar_select %p31, %s33, %s24
      %p35 = scmp.ge.s32.totalorder %s34, 2
      %s36 = scalar_select %p35, 0, %s34
      %s37 = ssub.s32 %s24, %s36
      %p38 = scmp.eq.s32.totalorder %s37, 0
      %s40 = sadd.s32 %s39, 1
      %s41 = scalar_select %p38, %s39, %s40
      %p44 = pneg %p38
      %p45 = scmp.eq.s32.totalorder %s17, 1
      %p46 = por %p44, %p45
      %p47 = scmp.ne.s32.totalorder %s39, %s42
      %p48 = scmp.eq.s32.totalorder %s17, 0
      %p49 = por %p47, %p48
      %p50 = scmp.ne.s32.totalorder %s39, %s42
      %p51 = scmp.eq.s32.totalorder %s22, 1
      %p52 = por %p50, %p51
      %p53 = scmp.ne.s32.totalorder %s42, %s43
      %p54 = scmp.eq.s32.totalorder %s22, 0
      %p55 = por %p53, %p54
      %p56 = scmp.ne.s32.totalorder %s42, %s43
      %p57 = scmp.eq.s32.totalorder %s23, 1
      %p58 = por %p56, %p57
      %p60 = scmp.ne.s32.totalorder %s43, %s59
      %p61 = scmp.eq.s32.totalorder %s23, 0
      %p62 = por %p60, %p61
      %s63 = ssub.s32 %s25, %s32
      %p64 = scmp.eq.s32.totalorder %s63, 0
      %s66 = sadd.s32 %s65, 1
      %s67 = scalar_select %p64, %s65, %s66
      %p70 = pneg %p64
      %p71 = scmp.eq.s32.totalorder %s17, 1
      %p72 = por %p70, %p71
      %p73 = scmp.ne.s32.totalorder %s65, %s68
      %p74 = scmp.eq.s32.totalorder %s17, 0
      %p75 = por %p73, %p74
      %p76 = scmp.ne.s32.totalorder %s65, %s68
      %p77 = scmp.eq.s32.totalorder %s22, 1
      %p78 = por %p76, %p77
      %p79 = scmp.ne.s32.totalorder %s68, %s69
      %p80 = scmp.eq.s32.totalorder %s22, 0
      %p81 = por %p79, %p80
      %p82 = scmp.ne.s32.totalorder %s68, %s69
      %p83 = scmp.eq.s32.totalorder %s23, 1
      %p84 = por %p82, %p83
      %p86 = scmp.ne.s32.totalorder %s69, %s85
      %p87 = scmp.eq.s32.totalorder %s23, 0
      %p88 = por %p86, %p87
      %s90 = sadd.s32 %s89, 1
      %p93 = scmp.eq.s32.totalorder %s17, 1
      %p94 = scmp.ne.s32.totalorder %s89, %s91
      %p95 = scmp.eq.s32.totalorder %s17, 0
      %p96 = por %p94, %p95
      %p97 = scmp.ne.s32.totalorder %s89, %s91
      %p98 = scmp.eq.s32.totalorder %s22, 1
      %p99 = por %p97, %p98
      %p100 = scmp.ne.s32.totalorder %s91, %s92
      %p101 = scmp.eq.s32.totalorder %s22, 0
      %p102 = por %p100, %p101
      %p103 = scmp.ne.s32.totalorder %s91, %s92
      %p104 = scmp.eq.s32.totalorder %s23, 1
      %p105 = por %p103, %p104
      %p107 = scmp.ne.s32.totalorder %s92, %s106
      %p108 = scmp.eq.s32.totalorder %s23, 0
      %p109 = por %p107, %p108
      %s111 = sadd.s32 %s110, 1
      %p114 = scmp.eq.s32.totalorder %s17, 1
      %p115 = scmp.ne.s32.totalorder %s110, %s112
      %p116 = scmp.eq.s32.totalorder %s17, 0
      %p117 = por %p115, %p116
      %p118 = scmp.ne.s32.totalorder %s110, %s112
      %p119 = scmp.eq.s32.totalorder %s22, 1
      %p120 = por %p118, %p119
      %p121 = scmp.ne.s32.totalorder %s112, %s113
      %p122 = scmp.eq.s32.totalorder %s22, 0
      %p123 = por %p121, %p122
      %p124 = scmp.ne.s32.totalorder %s112, %s113
      %p125 = scmp.eq.s32.totalorder %s23, 1
      %p126 = por %p124, %p125
      %p128 = scmp.ne.s32.totalorder %s113, %s127
      %p129 = scmp.eq.s32.totalorder %s23, 0
      %p130 = por %p128, %p129
      %s132 = sadd.s32 %s131, 1
      %p135 = scmp.eq.s32.totalorder %s17, 1
      %p136 = scmp.ne.s32.totalorder %s131, %s133
      %p137 = scmp.eq.s32.totalorder %s17, 0
      %p138 = por %p136, %p137
      %p139 = scmp.ne.s32.totalorder %s131, %s133
      %p140 = scmp.eq.s32.totalorder %s22, 1
      %p141 = por %p139, %p140
      %p142 = scmp.ne.s32.totalorder %s133, %s134
      %p143 = scmp.eq.s32.totalorder %s22, 0
      %p144 = por %p142, %p143
      %p145 = scmp.ne.s32.totalorder %s133, %s134
      %p146 = scmp.eq.s32.totalorder %s23, 1
      %p147 = por %p145, %p146
      %p149 = scmp.ne.s32.totalorder %s134, %s148
      %p150 = scmp.eq.s32.totalorder %s23, 0
      %p151 = por %p149, %p150
      %s153 = sadd.s32 %s152, 1
      %p156 = scmp.eq.s32.totalorder %s17, 1
      %p157 = scmp.ne.s32.totalorder %s152, %s154
      %p158 = scmp.eq.s32.totalorder %s17, 0
      %p159 = por %p157, %p158
      %p160 = scmp.ne.s32.totalorder %s152, %s154
      %p161 = scmp.eq.s32.totalorder %s22, 1
      %p162 = por %p160, %p161
      %p163 = scmp.ne.s32.totalorder %s154, %s155
      %p164 = scmp.eq.s32.totalorder %s22, 0
      %p165 = por %p163, %p164
      %p166 = scmp.ne.s32.totalorder %s154, %s155
      %p167 = scmp.eq.s32.totalorder %s23, 1
      %p168 = por %p166, %p167
      %p170 = scmp.ne.s32.totalorder %s155, %s169
      %p171 = scmp.eq.s32.totalorder %s23, 0
      %p172 = por %p170, %p171
      %s173 = ssub.s32 %s24, %s36
      %s174 = ssub.s32 %s25, %s32
      %s175 = sor.u32 %s173, %s174
      %p176 = scmp.eq.s32.totalorder %s175, 0
      %s178 = sadd.s32 %s177, 1
      %s179 = scalar_select %p176, %s177, %s178
      %p182 = pneg %p176
      %p183 = scmp.eq.s32.totalorder %s17, 1
      %p184 = por %p182, %p183
      %p185 = scmp.ne.s32.totalorder %s177, %s180
      %p186 = scmp.eq.s32.totalorder %s17, 0
      %p187 = por %p185, %p186
      %p188 = scmp.ne.s32.totalorder %s177, %s180
      %p189 = scmp.eq.s32.totalorder %s22, 1
      %p190 = por %p188, %p189
      %p191 = scmp.ne.s32.totalorder %s180, %s181
      %p192 = scmp.eq.s32.totalorder %s22, 0
      %p193 = por %p191, %p192
      %p194 = scmp.ne.s32.totalorder %s180, %s181
      %p195 = scmp.eq.s32.totalorder %s23, 1
      %p196 = por %p194, %p195
      %p198 = scmp.ne.s32.totalorder %s181, %s197
      %p199 = scmp.eq.s32.totalorder %s23, 0
      %p200 = por %p198, %p199
      %p201 = scmp.le.s32.totalorder 1, %s17
      %p202 = scmp.lt.s32.totalorder %s17, 3
      %p203 = pnand %p201, %p202
      %p204 = pneg %p203
      // Predicated region
      $region9: #{fjsp_actor_forward.1} parent=5 // pred_check
        _
      $region10: #{fjsp_actor_forward.1} parent=5 // pred_check_branch
        %206 = sbr.rel (%p203) target = $region12
      $region11: #{fjsp_actor_forward.1} parent=5 // pred_region
        %s207 = ssub.s32 %s17, 1
        // Predicated region
        $region13: #{fjsp_actor_forward.1} parent=11 // pred_check
          %p208 = pneg %p81
        $region14: #{fjsp_actor_forward.1} parent=11 // pred_check_branch
          %210 = sbr.rel (%p208) target = $region16
        $region15: #{fjsp_actor_forward.1} parent=11 // pred_region
          %p211 = scmp.lt.s32.totalorder %s27, 0
          %s212 = scalar_select %p211, %s27, 0
          %s213 = smul.addr %s212, 8
          %s214 = scalar_lea.vmem %s1, %s213
        $region16: #{fjsp_actor_forward.1} parent=11 // pred_fallthru
          _
        // Predicated region
        $region17: #{fjsp_actor_forward.1} parent=11 // pred_check
          %p215 = pneg %p102
        $region18: #{fjsp_actor_forward.1} parent=11 // pred_check_branch
          %217 = sbr.rel (%p215) target = $region20
        $region19: #{fjsp_actor_forward.1} parent=11 // pred_region
          _
        $region20: #{fjsp_actor_forward.1} parent=11 // pred_fallthru
          _
        // Predicated region
        $region21: #{fjsp_actor_forward.1} parent=11 // pred_check
          %p218 = pneg %p123
        $region22: #{fjsp_actor_forward.1} parent=11 // pred_check_branch
          %220 = sbr.rel (%p218) target = $region24
        $region23: #{fjsp_actor_forward.1} parent=11 // pred_region
          _
        $region24: #{fjsp_actor_forward.1} parent=11 // pred_fallthru
          _
        // Predicated region
        $region25: #{fjsp_actor_forward.1} parent=11 // pred_check
          %p221 = pneg %p144
        $region26: #{fjsp_actor_forward.1} parent=11 // pred_check_branch
          %223 = sbr.rel (%p221) target = $region28
        $region27: #{fjsp_actor_forward.1} parent=11 // pred_region
          _
        $region28: #{fjsp_actor_forward.1} parent=11 // pred_fallthru
          _
        // Predicated region
        $region29: #{fjsp_actor_forward.1} parent=11 // pred_check
          %p224 = pneg %p165
        $region30: #{fjsp_actor_forward.1} parent=11 // pred_check_branch
          %226 = sbr.rel (%p224) target = $region32
        $region31: #{fjsp_actor_forward.1} parent=11 // pred_region
          _
        $region32: #{fjsp_actor_forward.1} parent=11 // pred_fallthru
          _
      $region12: #{fjsp_actor_forward.1} parent=5 // pred_fallthru
        _
      %p227 = scmp.lt.s32.totalorder %s17, 2
      // Predicated region
      $region33: #{fjsp_actor_forward.1} parent=5 // pred_check
        %p228 = pneg %p227
      $region34: #{fjsp_actor_forward.1} parent=5 // pred_check_branch
        %230 = sbr.rel (%p228) target = $region36
      $region35: #{fjsp_actor_forward.1} parent=5 // pred_region
        // Predicated region
        $region37: #{fjsp_actor_forward.1} parent=35 // pred_check
          %p231 = pneg %p49
        $region38: #{fjsp_actor_forward.1} parent=35 // pred_check_branch
          %233 = sbr.rel (%p231) target = $region40
        $region39: #{fjsp_actor_forward.1} parent=35 // pred_region
          %p234 = scmp.lt.s32.totalorder %s24, 1
          %s235 = scalar_select %p234, %s24, 1
          %s236 = smul.addr %s235, 4
          %s237 = smul.addr %s236, 8
          %s238 = scalar_lea.vmem %s0, %s237
        $region40: #{fjsp_actor_forward.1} parent=35 // pred_fallthru
          _
      $region36: #{fjsp_actor_forward.1} parent=5 // pred_fallthru
        _
      %p239 = scmp.le.s32.totalorder 1, %s17
      %p240 = scmp.lt.s32.totalorder %s17, 3
      %p241 = pnand %p239, %p240
      %p242 = pneg %p241
      // Predicated region
      $region41: #{fjsp_actor_forward.1} parent=5 // pred_check
        _
      $region42: #{fjsp_actor_forward.1} parent=5 // pred_check_branch
        %244 = sbr.rel (%p241) target = $region44
      $region43: #{fjsp_actor_forward.1} parent=5 // pred_region
        %s245 = ssub.s32 %s17, 1
        %p246 = scmp.lt.s32.totalorder %s26, 1
        %s247 = scalar_select %p246, %s26, 1
        %s248 = smul.addr %s247, 4
        %s249 = smul.addr %s248, 8
        %s250 = scalar_lea.vmem %s0, %s249
        %p251 = pneg %p55
        %p252 = pneg %p52
        %p253 = scmp.lt.s32.totalorder %s27, 0
        %s254 = scalar_select %p253, %s27, 0
        %s255 = smul.addr %s254, 8
        %s256 = scalar_lea.vmem %s1, %s255
        %p257 = pneg %p81
        %p258 = pneg %p78
        %p259 = pneg %p102
        %p260 = pneg %p99
        %p261 = pneg %p123
        %p262 = pneg %p120
        %p263 = pneg %p144
        %p264 = pneg %p141
        %p265 = pneg %p165
        %p266 = pneg %p162
        %p267 = pneg %p193
        %p268 = pneg %p190
        %s269 = sand.u32 %s180, 1
        %s270 = scalar_lea.sflag [#allocation4], %s269
        %s271 = sand.u32 %s180, 1
        %s272 = scalar_lea.vmem [#allocation3], %s271
        %p273 = scmp.lt.s32.totalorder %s26, 1
        %s274 = scalar_select %p273, %s26, 1
        %s275 = smul.addr %s274, 4
        %s276 = smul.addr %s275, 8
        %s277 = scalar_lea.vmem %s0, %s276
        %p278 = scmp.lt.s32.totalorder %s27, 0
        %s279 = scalar_select %p278, %s27, 0
        %s280 = smul.addr %s279, 8
        %s281 = scalar_lea.vmem %s1, %s280
        %v282 = vld [vmem:[%s277] sm:$0xff]
        %v283 = vld [vmem:[%s277 + $0x8] sm:$0xff]
        %v284 = vld [vmem:[%s277 + $0x10] sm:$0xff]
        %v285 = vld [vmem:[%s277 + $0x18] sm:$0xff]
        %v286 = vld [vmem:[%s281] sm:$0xff]
        %v287 = vld [vmem:[%s281 + $0x8] sm:$0x1]
        %vm288 = vcmask 72704
        %v290 = vsel %vm288, %v282, 0
        %v293 = vsel %vm288, %v283, 0
        %v296 = vsel %vm288, %v284, 0
        %v299 = vsel %vm288, %v285, 0
        %vm301 = vcmask 1040384
        %v303 = vsel %vm301, %v287, 0
        %305 = vmatprep.subr.mxu0 0.0
        %306 = vmatpush1.msra.mxu0 0.0
        %307 = vmatprep.subr.mxu0 0.0
        %308 = vmatpush1.msra.mxu0 0.0
        %309 = vmatprep.subr.mxu0 0.0
        %310 = vmatpush1.msra.mxu0 0.0
        %311 = vmatprep.subr.mxu0 0.0
        %312 = vmatpush1.msra.mxu0 0.0
        %313 = vmatprep.subr.mxu0 0.0
        %314 = vmatpush1.msra.mxu0 0.0
        %315 = vmatprep.subr.mxu0 0.0
        %316 = vmatpush1.msra.mxu0 0.0
        %317 = vmatprep.subr.mxu0 0.0
        %318 = vmatpush1.msra.mxu0 0.0
        %319 = vmatprep.subr.mxu0 0.0
        %320 = vmatpush1.msra.mxu0 0.0
        %321 = vmatprep.subr.mxu0 0.0
        %322 = vmatpush1.msra.mxu0 0.0
        %323 = vmatprep.subr.mxu0 0.0
        %324 = vmatpush1.msra.mxu0 0.0
        %325 = vmatprep.subr.mxu0 0.0
        %326 = vmatpush1.msra.mxu0 0.0
        %327 = vmatprep.subr.mxu0 0.0
        %328 = vmatpush1.msra.mxu0 0.0
        %329 = vmatprep.subr.mxu0 0.0
        %330 = vmatpush1.msra.mxu0 0.0
        %331 = vmatprep.subr.mxu0 0.0
        %332 = vmatpush1.msra.mxu0 0.0
        %333 = vmatprep.subr.mxu0 0.0
        %334 = vmatpush1.msra.mxu0 %v303
        %335 = vmatprep.subr.mxu0 0.0
        %336 = vmatpush1.msra.mxu0 %v286
        %337 = vmatprep.subr.mxu0 0.0
        %338 = vmatpush2.msra.mxu0 0.0
        %339 = vmatprep.subr.mxu0 0.0
        %340 = vmatpush2.msra.mxu0 0.0
        %341 = vmatprep.subr.mxu0 0.0
        %342 = vmatpush2.msra.mxu0 0.0
        %343 = vmatprep.subr.mxu0 0.0
        %344 = vmatpush2.msra.mxu0 0.0
        %345 = vmatprep.subr.mxu0 0.0
        %346 = vmatpush2.msra.mxu0 0.0
        %347 = vmatprep.subr.mxu0 0.0
        %348 = vmatpush2.msra.mxu0 0.0
        %349 = vmatprep.subr.mxu0 0.0
        %350 = vmatpush2.msra.mxu0 0.0
        %351 = vmatprep.subr.mxu0 0.0
        %352 = vmatpush2.msra.mxu0 0.0
        %353 = vmatprep.subr.mxu0 0.0
        %354 = vmatpush2.msra.mxu0 0.0
        %355 = vmatprep.subr.mxu0 0.0
        %356 = vmatpush2.msra.mxu0 0.0
        %357 = vmatprep.subr.mxu0 0.0
        %358 = vmatpush2.msra.mxu0 0.0
        %359 = vmatprep.subr.mxu0 0.0
        %360 = vmatpush2.msra.mxu0 0.0
        %361 = vmatprep.subr.mxu0 0.0
        %362 = vmatpush2.msra.mxu0 0.0
        %363 = vmatprep.subr.mxu0 0.0
        %364 = vmatpush2.msra.mxu0 0.0
        %365 = vmatprep.subr.mxu0 0.0
        %366 = vmatpush2.msra.mxu0 0.0
        %367 = vmatprep.subr.mxu0 0.0
        %368 = vmatpush2.msra.mxu0 0.0
        %369 = vmatprep.mubr.f32.mxu0 0.0
        %370 = vmatmul.mubr.f32.gmra.mxu0 %v290
        %v371 = vpop.f32.mrf.mxu0
        %v372 = vadd.f32 0.0, %v371
        %v373 = vpop.f32.mrf.mxu0
        %374 = vmatprep.mubr.f32.mxu0 0.0
        %375 = vmatmul.mubr.f32.gmra.mxu0 %v293
        %v376 = vpop.f32.mrf.mxu0
        %v377 = vadd.f32 0.0, %v376
        %v378 = vpop.f32.mrf.mxu0
        %379 = vmatprep.mubr.f32.mxu0 0.0
        %380 = vmatmul.mubr.f32.gmra.mxu0 %v296
        %v381 = vpop.f32.mrf.mxu0
        %v382 = vadd.f32 0.0, %v381
        %v383 = vpop.f32.mrf.mxu0
        %384 = vmatprep.mubr.f32.mxu0 0.0
        %385 = vmatmul.mubr.f32.gmra.mxu0 %v299
        %v386 = vpop.f32.mrf.mxu0
        %v387 = vadd.f32 0.0, %v386
        %v388 = vpop.f32.mrf.mxu0
        %389 = vdwg.mxu0
        %v390 = vmax.f32 %v372, 0.0
        %v391 = vmax.f32 %v377, 0.0
        %v392 = vmax.f32 %v382, 0.0
        %v393 = vmax.f32 %v387, 0.0
        %v394 = vld [vmem:[%s2] sm:$0xff]
        %v395 = vld [vmem:[%s2 + $0x8] sm:$0xff]
        %v396 = vld [vmem:[%s2 + $0x10] sm:$0xff]
        %v397 = vld [vmem:[%s2 + $0x18] sm:$0xff]
        %v398 = vld [vmem:[%s3] sm:$0xff]
        %v399 = vld [vmem:[%s3 + $0x8] sm:$0xff]
        %v400 = vld [vmem:[%s3 + $0x10] sm:$0xff]
        %v401 = vld [vmem:[%s3 + $0x18] sm:$0xff]
        %403 = vset.pattern.permute.xlu0 0
        %404 = vperm.xlu0 %403, %v398
        %v405 = vpop.permute.xlu0 %404
        %408 = vset.pattern.permute.xlu0 0
        %409 = vperm.xlu0 %408, %v399
        %v410 = vpop.permute.xlu0 %409
        %413 = vset.pattern.permute.xlu0 0
        %414 = vperm.xlu0 %413, %v400
        %v415 = vpop.permute.xlu0 %414
        %418 = vset.pattern.permute.xlu0 0
        %419 = vperm.xlu0 %418, %v401
        %v420 = vpop.permute.xlu0 %419
        %vm422 = vcmask 261120
        %v424 = vsel %vm422, %v394, 0
        %v427 = vsel %vm422, %v395, 0
        %v430 = vsel %vm422, %v396, 0
        %v433 = vsel %vm422, %v397, 0
        %435 = vmatprep.subr.mxu0 0.0
        %436 = vmatpush1.msra.mxu0 0.0
        %437 = vmatprep.subr.mxu0 0.0
        %438 = vmatpush1.msra.mxu0 0.0
        %439 = vmatprep.subr.mxu0 0.0
        %440 = vmatpush1.msra.mxu0 0.0
        %441 = vmatprep.subr.mxu0 0.0
        %442 = vmatpush1.msra.mxu0 0.0
        %443 = vmatprep.subr.mxu0 0.0
        %444 = vmatpush1.msra.mxu0 0.0
        %445 = vmatprep.subr.mxu0 0.0
        %446 = vmatpush1.msra.mxu0 0.0
        %447 = vmatprep.subr.mxu0 0.0
        %448 = vmatpush1.msra.mxu0 0.0
        %449 = vmatprep.subr.mxu0 0.0
        %450 = vmatpush1.msra.mxu0 0.0
        %451 = vmatprep.subr.mxu0 0.0
        %452 = vmatpush1.msra.mxu0 0.0
        %453 = vmatprep.subr.mxu0 0.0
        %454 = vmatpush1.msra.mxu0 0.0
        %455 = vmatprep.subr.mxu0 0.0
        %456 = vmatpush1.msra.mxu0 0.0
        %457 = vmatprep.subr.mxu0 0.0
        %458 = vmatpush1.msra.mxu0 0.0
        %459 = vmatprep.subr.mxu0 0.0
        %460 = vmatpush1.msra.mxu0 %v393
        %461 = vmatprep.subr.mxu0 0.0
        %462 = vmatpush1.msra.mxu0 %v392
        %463 = vmatprep.subr.mxu0 0.0
        %464 = vmatpush1.msra.mxu0 %v391
        %465 = vmatprep.subr.mxu0 0.0
        %466 = vmatpush1.msra.mxu0 %v390
        %467 = vmatprep.subr.mxu0 0.0
        %468 = vmatpush2.msra.mxu0 0.0
        %469 = vmatprep.subr.mxu0 0.0
        %470 = vmatpush2.msra.mxu0 0.0
        %471 = vmatprep.subr.mxu0 0.0
        %472 = vmatpush2.msra.mxu0 0.0
        %473 = vmatprep.subr.mxu0 0.0
        %474 = vmatpush2.msra.mxu0 0.0
        %475 = vmatprep.subr.mxu0 0.0
        %476 = vmatpush2.msra.mxu0 0.0
        %477 = vmatprep.subr.mxu0 0.0
        %478 = vmatpush2.msra.mxu0 0.0
        %479 = vmatprep.subr.mxu0 0.0
        %480 = vmatpush2.msra.mxu0 0.0
        %481 = vmatprep.subr.mxu0 0.0
        %482 = vmatpush2.msra.mxu0 0.0
        %483 = vmatprep.subr.mxu0 0.0
        %484 = vmatpush2.msra.mxu0 0.0
        %485 = vmatprep.subr.mxu0 0.0
        %486 = vmatpush2.msra.mxu0 0.0
        %487 = vmatprep.subr.mxu0 0.0
        %488 = vmatpush2.msra.mxu0 0.0
        %489 = vmatprep.subr.mxu0 0.0
        %490 = vmatpush2.msra.mxu0 0.0
        %491 = vmatprep.subr.mxu0 0.0
        %492 = vmatpush2.msra.mxu0 0.0
        %493 = vmatprep.subr.mxu0 0.0
        %494 = vmatpush2.msra.mxu0 0.0
        %495 = vmatprep.subr.mxu0 0.0
        %496 = vmatpush2.msra.mxu0 0.0
        %497 = vmatprep.subr.mxu0 0.0
        %498 = vmatpush2.msra.mxu0 0.0
        %499 = vmatprep.mubr.f32.mxu0 0.0
        %500 = vmatmul.mubr.f32.gmra.mxu0 %v424
        %v501 = vpop.f32.mrf.mxu0
        %v502 = vadd.f32 %v405, %v501
        %v503 = vpop.f32.mrf.mxu0
        %504 = vmatprep.mubr.f32.mxu0 0.0
        %505 = vmatmul.mubr.f32.gmra.mxu0 %v427
        %v506 = vpop.f32.mrf.mxu0
        %v507 = vadd.f32 %v410, %v506
        %v508 = vpop.f32.mrf.mxu0
        %509 = vmatprep.mubr.f32.mxu0 0.0
        %510 = vmatmul.mubr.f32.gmra.mxu0 %v430
        %v511 = vpop.f32.mrf.mxu0
        %v512 = vadd.f32 %v415, %v511
        %v513 = vpop.f32.mrf.mxu0
        %514 = vmatprep.mubr.f32.mxu0 0.0
        %515 = vmatmul.mubr.f32.gmra.mxu0 %v433
        %v516 = vpop.f32.mrf.mxu0
        %v517 = vadd.f32 %v420, %v516
        %v518 = vpop.f32.mrf.mxu0
        %519 = vdwg.mxu0
        %v520 = vmax.f32 %v502, 0.0
        %v521 = vmax.f32 %v507, 0.0
        %v522 = vmax.f32 %v512, 0.0
        %v523 = vmax.f32 %v517, 0.0
        %v524 = vld [vmem:[%s4] sm:$0xff]
        %v525 = vld [vmem:[%s4 + $0x8] sm:$0xff]
        %v526 = vld [vmem:[%s4 + $0x10] sm:$0xff]
        %v527 = vld [vmem:[%s4 + $0x18] sm:$0xff]
        %529 = vset.pattern.permute.xlu0 0
        %530 = vperm.xlu0 %529, %v524
        %v531 = vpop.permute.xlu0 %530
        %534 = vset.pattern.permute.xlu0 0
        %535 = vperm.xlu0 %534, %v525
        %v536 = vpop.permute.xlu0 %535
        %539 = vset.pattern.permute.xlu0 0
        %540 = vperm.xlu0 %539, %v526
        %v541 = vpop.permute.xlu0 %540
        %544 = vset.pattern.permute.xlu0 0
        %545 = vperm.xlu0 %544, %v527
        %v546 = vpop.permute.xlu0 %545
        %v548 = vmul.f32 %v520, %v531
        %v549 = vmul.f32 %v521, %v536
        %v550 = vmul.f32 %v522, %v541
        %v551 = vmul.f32 %v523, %v546
        %v552 = vadd.f32 %v548, %v549
        %v553 = vadd.f32 %v552, %v550
        %v554 = vadd.f32 %v553, %v551
        %v555 = vrot.slane %v554, 4
        %v556 = vadd.f32 %v554, %v555
        %v557 = vrot.slane %v556, 2
        %v558 = vadd.f32 %v556, %v557
        %v559 = vrot.slane %v558, 1
        %v560 = vadd.f32 %v558, %v559
        %v561 = vld [vmem:[#allocation2] sm:$0x1]
        %563 = vset.pattern.permute.xlu0 0
        %564 = vperm.xlu0 %563, %v561
        %v565 = vpop.permute.xlu0 %564
        %v567 = vlaneseq
        %v568 = vshrl.u32 %v567, 7
        %v569 = vsub.s32 0, %v568
        %v570 = vrot.slane %v565, %v569
        %v571 = vadd.f32 %v560, %v570
        %572 = vst [vmem:[%s272] sm:$0x1] %v571
        %s573 = sand.u32 %s180, 1
        %s574 = scalar_lea.sflag [#allocation4], %s573
        %s575 = sand.u32 %s180, 1
        %s576 = scalar_lea.vmem [#allocation3], %s575
        // Predicated region
        $region45: #{fjsp_actor_forward.1} parent=43 // pred_check
          %p577 = pneg %p190
        $region46: #{fjsp_actor_forward.1} parent=43 // pred_check_branch
          %579 = sbr.rel (%p577) target = $region48
        $region47: #{fjsp_actor_forward.1} parent=43 // pred_region
          %s581 = ssub.s32 16, 16
          %582 = vsyncadd %s574, %s581
          %s583 = sadd.s32 %s27, %s26
          %s584 = smul.addr %s583, 16
          %s585 = scalar_lea.hbm %s6, %s584
          %s587 = sshll.u32 %s576, 4
          %s588 = int_to_ptr.vmem [resolvable:$true] %s587
          %590 = dma.vmem_to_hbm [thread:$0]  %s588, 16, %s585, %s574
        $region48: #{fjsp_actor_forward.1} parent=43 // pred_fallthru
          _
      $region44: #{fjsp_actor_forward.1} parent=5 // pred_fallthru
        _
      %p591 = scmp.le.s32.totalorder 2, %s17
      // Predicated region
      $region49: #{fjsp_actor_forward.1} parent=5 // pred_check
        %p592 = pneg %p591
      $region50: #{fjsp_actor_forward.1} parent=5 // pred_check_branch
        %594 = sbr.rel (%p592) target = $region52
      $region51: #{fjsp_actor_forward.1} parent=5 // pred_region
        %s595 = ssub.s32 %s17, 2
        // Predicated region
        $region53: #{fjsp_actor_forward.1} parent=51 // pred_check
          %p596 = pneg %p196
        $region54: #{fjsp_actor_forward.1} parent=51 // pred_check_branch
          %598 = sbr.rel (%p596) target = $region56
        $region55: #{fjsp_actor_forward.1} parent=51 // pred_region
          %s599 = sand.u32 %s181, 1
          %s600 = scalar_lea.sflag [#allocation4], %s599
          %s601 = sand.u32 %s181, 1
          %s602 = scalar_lea.vmem [#allocation3], %s601
          %603 = dma.done %s600, 16
        $region56: #{fjsp_actor_forward.1} parent=51 // pred_fallthru
          _
      $region52: #{fjsp_actor_forward.1} parent=5 // pred_fallthru
        _
    $region6: #{fjsp_actor_forward.1} parent=1 // loop_footer
      %s21 = sadd.s32 1, %s17
    $region7: #{fjsp_actor_forward.1} parent=1 // loop_footer_branch
      %16 = sbr.rel target = $region3
    $region8: #{fjsp_actor_forward.1} parent=1 // loop_exit
      _
    %604 = vsyncpa [#allocation4], 1
    %s605 = scalar_lea.sflag [#allocation4], 1
    %606 = vsyncpa %s605, 1

</llo_original>
